<compile_context>
chip_gen: v7x
topology: tpu7x:2x2x1
jax: 0.10.0
libtpu: 0.0.40
codegen_flags: <defaults>
</compile_context>

<pallas_src>
import functools

import jax
import jax.numpy as jnp
import numpy as np
from jax import lax
from jax.experimental import pallas as pl
from jax.experimental.pallas import tpu as pltpu

EPS = 1e-7
LANES = 128
ROW_ALIGN = 32                      # sublane multiple valid for f32/bf16/int8
MAX_PREDS_BLOCK_BYTES = 8 * 1024 * 1024
VMEM_LIMIT_BYTES = 32 * 1024 * 1024


def _round_up(x, m):
    return ((x + m - 1) // m) * m


def _f1_loss_kernel(preds_ref, targets_ref, out_ref, acc_ref):
    # preds_ref:   (C, tr, 128)  native dtype (lane-dense batch layout)
    # targets_ref: (tr, 128)     int8/int32 (padded entries are -1)
    # out_ref:     (1, 8, 128)   f32 per-core raw counts (rows 0/1/2 = TP/FP/FN)
    # acc_ref:     (3, 8, 128)   int32 per-core accumulators
    step = pl.program_id(1)

    @pl.when(step == 0)
    def _():
        acc_ref[...] = jnp.zeros_like(acc_ref)

    C, tr, _ = preds_ref.shape
    t = targets_ref[...].astype(jnp.int32)                 # (tr, 128)

    # argmax over class planes, first-occurrence tie-break (strict >).
    max_val = preds_ref[0].astype(jnp.float32)             # (tr, 128)
    pred_cls = jnp.zeros(t.shape, dtype=jnp.int32)
    for c in range(1, C):
        row = preds_ref[c].astype(jnp.float32)
        better = row > max_val
        max_val = jnp.where(better, row, max_val)
        pred_cls = jnp.where(better, c, pred_cls)

    pred_is1 = pred_cls == 1
    pred_is0 = pred_cls == 0
    tgt_is1 = t == 1
    tgt_is0 = t == 0

    def fold(mask):
        # (tr, 128) bool -> (8, 128) int32 via vreg+vreg adds (no XLU).
        return jnp.sum(mask.astype(jnp.int32).reshape(tr // 8, 8, LANES),
                       axis=0)

    acc_ref[0] += fold(jnp.logical_and(pred_is1, tgt_is1))  # TP
    acc_ref[1] += fold(jnp.logical_and(pred_is1, tgt_is0))  # FP
    acc_ref[2] += fold(jnp.logical_and(pred_is0, tgt_is1))  # FN

    @pl.when(step == pl.num_programs(1) - 1)
    def _():
        tp = jnp.sum(acc_ref[0]).astype(jnp.float32)
        fp = jnp.sum(acc_ref[1]).astype(jnp.float32)
        fn = jnp.sum(acc_ref[2]).astype(jnp.float32)
        sub = lax.broadcasted_iota(jnp.int32, (8, LANES), 0)
        plane = jnp.where(sub == 0, tp,
                          jnp.where(sub == 1, fp,
                                    jnp.where(sub == 2, fn, 0.0)))
        out_ref[0] = plane


@functools.partial(jax.jit, static_argnames=("tile_rows", "num_cores"))
def f1_loss(preds, targets, *, tile_rows=4096, num_cores=2):
    """preds: (B, C) float logits; targets: (B,) integer labels -> f32 scalar."""
    B, C = preds.shape
    itemsize = preds.dtype.itemsize

    # --- pick a lane-dense batch tile (dtype-aware VMEM cap) -----------------
    rows_total = pl.cdiv(B, LANES)          # number of 128-wide batch rows
    max_rows_vmem = max(ROW_ALIGN, MAX_PREDS_BLOCK_BYTES // (C * LANES * itemsize))
    tr = min(tile_rows, max(rows_total, ROW_ALIGN), max_rows_vmem)
    tr = max(ROW_ALIGN, (tr // ROW_ALIGN) * ROW_ALIGN)

    tile_b = tr * LANES
    steps_total = pl.cdiv(B, tile_b)
    nc = num_cores if steps_total >= num_cores else 1   # core split only if >1 step
    spc = pl.cdiv(steps_total, nc)                      # steps per core
    B_pad = nc * spc * tile_b
    R = B_pad // LANES

    # --- lane-dense layout: batch -> (sublane, lane) -------------------------
    # Padded preds rows are 0 (argmax -> class 0); padded targets are -1, so
    # padding contributes nothing to TP / FP / FN.
    preds_p = jnp.pad(preds, ((0, B_pad - B), (0, 0)))              # (B_pad, C)
    preds3 = preds_p.T.reshape(C, R, LANES)                         # (C, R, 128)
    tgt_dtype = jnp.int8 if C <= 127 else jnp.int32
    targets_p = jnp.pad(targets.astype(tgt_dtype), (0, B_pad - B),
                        constant_values=-1)
    targets2 = targets_p.reshape(R, LANES)                          # (R, 128)

    counts = pl.pallas_call(
        _f1_loss_kernel,
        out_shape=jax.ShapeDtypeStruct((nc, 8, LANES), jnp.float32),
        grid_spec=pltpu.PrefetchScalarGridSpec(
            num_scalar_prefetch=0,
            grid=(nc, spc),
            in_specs=[
                pl.BlockSpec((C, tr, LANES),
                             lambda core, step: (0, core * spc + step, 0)),
                pl.BlockSpec((tr, LANES),
                             lambda core, step: (core * spc + step, 0)),
            ],
            out_specs=pl.BlockSpec((1, 8, LANES),
                                   lambda core, step: (core, 0, 0)),
            scratch_shapes=[pltpu.VMEM((3, 8, LANES), jnp.int32)],
        ),
        compiler_params=pltpu.CompilerParams(
            dimension_semantics=("parallel", "arbitrary"),
            vmem_limit_bytes=VMEM_LIMIT_BYTES),
    )(preds3, targets2)

    # Combine per-core raw counts and finish the scalar F1 math (exact int
    # counts carried in f32, matching the PyTorch .float() behavior).
    tp = jnp.sum(counts[:, 0, 0])
    fp = jnp.sum(counts[:, 1, 0])
    fn = jnp.sum(counts[:, 2, 0])
    precision = tp / (tp + fp + EPS)
    recall = tp / (tp + fn + EPS)
    f1 = 2.0 * precision * recall / (precision + recall + EPS)
    return 1.0 - f1


def f1_loss_ref(preds, targets):
    """Pure-JAX reference mirroring the PyTorch module."""
    pred_cls = jnp.argmax(preds, axis=1)
    t = targets.astype(jnp.int32)
    tp = jnp.sum((pred_cls == 1) & (t == 1)).astype(jnp.float32)
    fp = jnp.sum((pred_cls == 1) & (t == 0)).astype(jnp.float32)
    fn = jnp.sum((pred_cls == 0) & (t == 1)).astype(jnp.float32)
    precision = tp / (tp + fp + EPS)
    recall = tp / (tp + fn + EPS)
    f1 = 2.0 * precision * recall / (precision + recall + EPS)
    return 1.0 - f1


if __name__ == "__main__":
    key = jax.random.PRNGKey(0)
    k1, k2, k3, k4, k5, k6 = jax.random.split(key, 6)

    # Small shapes consistent with the module's forward: (B, C) logits and
    # integer targets.  B not a multiple of the tile exercises padding; the
    # last case uses a tiny tile override to exercise multi-step accumulation
    # and the 2-core batch split.
    cases = [
        (jax.random.normal(k1, (200, 2), dtype=jnp.float32),
         jax.random.randint(k2, (200,), 0, 2, dtype=jnp.int32), {}),
        (jax.random.normal(k3, (384, 4), dtype=jnp.float32),
         jax.random.randint(k4, (384,), 0, 4, dtype=jnp.int32), {}),
        (jax.random.normal(k5, (10000, 2), dtype=jnp.float32),
         jax.random.randint(k6, (10000,), 0, 2, dtype=jnp.int32),
         {"tile_rows": 32}),
    ]
    for preds, targets, kw in cases:
        got = jax.block_until_ready(f1_loss(preds, targets, **kw))
        ref = jax.block_until_ready(f1_loss_ref(preds, targets))
        np.testing.assert_allclose(np.asarray(got), np.asarray(ref),
                                   rtol=1e-5, atol=1e-6)
    print("KERNEL_OK")
</pallas_src>

<mosaic_0001>
module attributes {stable_mosaic.version = 11 : i64} {
  func.func @_f1_loss_kernel(%arg0: i32, %arg1: i32, %arg2: memref<2x32x128xf32, #tpu.memory_space<vmem>>, %arg3: memref<32x128xi8, #tpu.memory_space<vmem>>, %arg4: memref<1x8x128xf32, #tpu.memory_space<vmem>>, %arg5: memref<3x8x128xi32, #tpu.memory_space<vmem>>) attributes {dimension_semantics = [#tpu.dimension_semantics<parallel>, #tpu.dimension_semantics<arbitrary>], iteration_bounds = array<i64: 1, 1>, scalar_prefetch = 0 : i64, scratch_operands = 1 : i64, tpu.core_type = #tpu.core_type<tc>, window_params = [{transform_indices = @transform_0, window_bounds = array<i64: 2, 32, 128>}, {transform_indices = @transform_1, window_bounds = array<i64: 32, 128>}, {transform_indices = @transform_2, window_bounds = array<i64: 1, 8, 128>}]} {
    %c0_i32 = arith.constant 0 : i32
    %0 = arith.cmpi eq, %arg1, %c0_i32 : i32
    %1 = arith.extui %0 : i1 to i32
    %c0_i32_0 = arith.constant 0 : i32
    %2 = arith.cmpi ne, %1, %c0_i32_0 : i32
    scf.if %2 {
      %c0_i32_33 = arith.constant 0 : i32
      %54 = vector.broadcast %c0_i32_33 : i32 to vector<3x8x128xi32>
      %c0_34 = arith.constant 0 : index
      %c0_35 = arith.constant 0 : index
      %c0_36 = arith.constant 0 : index
      %55 = vector.load %arg5[%c0_34, %c0_35, %c0_36] : memref<3x8x128xi32, #tpu.memory_space<vmem>>, vector<3x8x128xi32>
      tpu.vector_store %arg5[%c0_34, %c0_35, %c0_36], %54 {strides = array<i32>} : memref<3x8x128xi32, #tpu.memory_space<vmem>>, vector<3x8x128xi32>,
    } else {
    }
    %c0 = arith.constant 0 : index
    %c0_1 = arith.constant 0 : index
    %3 = vector.load %arg3[%c0, %c0_1] : memref<32x128xi8, #tpu.memory_space<vmem>>, vector<32x128xi8>
    %4 = arith.extsi %3 : vector<32x128xi8> to vector<32x128xi32>
    %c0_2 = arith.constant 0 : index
    %c0_3 = arith.constant 0 : index
    %c0_4 = arith.constant 0 : index
    %5 = vector.load %arg2[%c0_2, %c0_3, %c0_4] : memref<2x32x128xf32, #tpu.memory_space<vmem>>, vector<1x32x128xf32>
    %6 = vector.shape_cast %5 : vector<1x32x128xf32> to vector<32x128xf32>
    %c0_i32_5 = arith.constant 0 : i32
    %7 = vector.broadcast %c0_i32_5 : i32 to vector<32x128xi32>
    %c1 = arith.constant 1 : index
    %c0_6 = arith.constant 0 : index
    %c0_7 = arith.constant 0 : index
    %8 = vector.load %arg2[%c1, %c0_6, %c0_7] : memref<2x32x128xf32, #tpu.memory_space<vmem>>, vector<1x32x128xf32>
    %9 = vector.shape_cast %8 : vector<1x32x128xf32> to vector<32x128xf32>
    %10 = arith.cmpf ogt, %9, %6 : vector<32x128xf32>
    %c1_i32 = arith.constant 1 : i32
    %11 = vector.broadcast %c1_i32 : i32 to vector<32x128xi32>
    %12 = arith.select %10, %11, %7 : vector<32x128xi1>, vector<32x128xi32>
    %c1_i32_8 = arith.constant 1 : i32
    %13 = vector.broadcast %c1_i32_8 : i32 to vector<32x128xi32>
    %14 = arith.cmpi eq, %12, %13 : vector<32x128xi32>
    %c0_i32_9 = arith.constant 0 : i32
    %15 = vector.broadcast %c0_i32_9 : i32 to vector<32x128xi32>
    %16 = arith.cmpi eq, %12, %15 : vector<32x128xi32>
    %c1_i32_10 = arith.constant 1 : i32
    %17 = vector.broadcast %c1_i32_10 : i32 to vector<32x128xi32>
    %18 = arith.cmpi eq, %4, %17 : vector<32x128xi32>
    %c0_i32_11 = arith.constant 0 : i32
    %19 = vector.broadcast %c0_i32_11 : i32 to vector<32x128xi32>
    %20 = arith.cmpi eq, %4, %19 : vector<32x128xi32>
    %c0_12 = arith.constant 0 : index
    %c0_13 = arith.constant 0 : index
    %c0_14 = arith.constant 0 : index
    %21 = vector.load %arg5[%c0_12, %c0_13, %c0_14] : memref<3x8x128xi32, #tpu.memory_space<vmem>>, vector<1x8x128xi32>
    %22 = vector.shape_cast %21 : vector<1x8x128xi32> to vector<8x128xi32>
    %23 = arith.andi %14, %18 : vector<32x128xi1>
    %24 = arith.extui %23 : vector<32x128xi1> to vector<32x128xi32>
    %25 = vector.shape_cast %24 : vector<32x128xi32> to vector<4x8x128xi32>
    %cst = arith.constant dense<0> : vector<8x128xi32>
    %26 = vector.multi_reduction <add>, %25, %cst [0] : vector<4x8x128xi32> to vector<8x128xi32>
    %27 = arith.addi %22, %26 : vector<8x128xi32>
    %c0_15 = arith.constant 0 : index
    %c0_16 = arith.constant 0 : index
    %c0_17 = arith.constant 0 : index
    %28 = vector.load %arg5[%c0_15, %c0_16, %c0_17] : memref<3x8x128xi32, #tpu.memory_space<vmem>>, vector<1x8x128xi32>
    %29 = vector.shape_cast %28 : vector<1x8x128xi32> to vector<8x128xi32>
    %30 = vector.shape_cast %27 : vector<8x128xi32> to vector<1x8x128xi32>
    tpu.vector_store %arg5[%c0_15, %c0_16, %c0_17], %30 {strides = array<i32>} : memref<3x8x128xi32, #tpu.memory_space<vmem>>, vector<1x8x128xi32>,
    %c1_18 = arith.constant 1 : index
    %c0_19 = arith.constant 0 : index
    %c0_20 = arith.constant 0 : index
    %31 = vector.load %arg5[%c1_18, %c0_19, %c0_20] : memref<3x8x128xi32, #tpu.memory_space<vmem>>, vector<1x8x128xi32>
    %32 = vector.shape_cast %31 : vector<1x8x128xi32> to vector<8x128xi32>
    %33 = arith.andi %14, %20 : vector<32x128xi1>
    %34 = arith.extui %33 : vector<32x128xi1> to vector<32x128xi32>
    %35 = vector.shape_cast %34 : vector<32x128xi32> to vector<4x8x128xi32>
    %cst_21 = arith.constant dense<0> : vector<8x128xi32>
    %36 = vector.multi_reduction <add>, %35, %cst_21 [0] : vector<4x8x128xi32> to vector<8x128xi32>
    %37 = arith.addi %32, %36 : vector<8x128xi32>
    %c1_22 = arith.constant 1 : index
    %c0_23 = arith.constant 0 : index
    %c0_24 = arith.constant 0 : index
    %38 = vector.load %arg5[%c1_22, %c0_23, %c0_24] : memref<3x8x128xi32, #tpu.memory_space<vmem>>, vector<1x8x128xi32>
    %39 = vector.shape_cast %38 : vector<1x8x128xi32> to vector<8x128xi32>
    %40 = vector.shape_cast %37 : vector<8x128xi32> to vector<1x8x128xi32>
    tpu.vector_store %arg5[%c1_22, %c0_23, %c0_24], %40 {strides = array<i32>} : memref<3x8x128xi32, #tpu.memory_space<vmem>>, vector<1x8x128xi32>,
    %c2 = arith.constant 2 : index
    %c0_25 = arith.constant 0 : index
    %c0_26 = arith.constant 0 : index
    %41 = vector.load %arg5[%c2, %c0_25, %c0_26] : memref<3x8x128xi32, #tpu.memory_space<vmem>>, vector<1x8x128xi32>
    %42 = vector.shape_cast %41 : vector<1x8x128xi32> to vector<8x128xi32>
    %43 = arith.andi %16, %18 : vector<32x128xi1>
    %44 = arith.extui %43 : vector<32x128xi1> to vector<32x128xi32>
    %45 = vector.shape_cast %44 : vector<32x128xi32> to vector<4x8x128xi32>
    %cst_27 = arith.constant dense<0> : vector<8x128xi32>
    %46 = vector.multi_reduction <add>, %45, %cst_27 [0] : vector<4x8x128xi32> to vector<8x128xi32>
    %47 = arith.addi %42, %46 : vector<8x128xi32>
    %c2_28 = arith.constant 2 : index
    %c0_29 = arith.constant 0 : index
    %c0_30 = arith.constant 0 : index
    %48 = vector.load %arg5[%c2_28, %c0_29, %c0_30] : memref<3x8x128xi32, #tpu.memory_space<vmem>>, vector<1x8x128xi32>
    %49 = vector.shape_cast %48 : vector<1x8x128xi32> to vector<8x128xi32>
    %50 = vector.shape_cast %47 : vector<8x128xi32> to vector<1x8x128xi32>
    tpu.vector_store %arg5[%c2_28, %c0_29, %c0_30], %50 {strides = array<i32>} : memref<3x8x128xi32, #tpu.memory_space<vmem>>, vector<1x8x128xi32>,
    %c0_i32_31 = arith.constant 0 : i32
    %51 = arith.cmpi eq, %arg1, %c0_i32_31 : i32
    %52 = arith.extui %51 : i1 to i32
    %c0_i32_32 = arith.constant 0 : i32
    %53 = arith.cmpi ne, %52, %c0_i32_32 : i32
    scf.if %53 {
      %c0_33 = arith.constant 0 : index
      %c0_34 = arith.constant 0 : index
      %c0_35 = arith.constant 0 : index
      %54 = vector.load %arg5[%c0_33, %c0_34, %c0_35] : memref<3x8x128xi32, #tpu.memory_space<vmem>>, vector<1x8x128xi32>
      %55 = vector.shape_cast %54 : vector<1x8x128xi32> to vector<8x128xi32>
      %56 = vector.shape_cast %55 : vector<8x128xi32> to vector<1x8x128xi32>
      %cst_36 = arith.constant dense<0> : vector<1xi32>
      %57 = vector.multi_reduction <add>, %56, %cst_36 [1, 2] : vector<1x8x128xi32> to vector<1xi32>
      %58 = vector.shape_cast %57 : vector<1xi32> to vector<1x1x1xi32>
      %59 = vector.extract %58[0, 0, 0] : i32 from vector<1x1x1xi32>
      %60 = arith.sitofp %59 : i32 to f32
      %c1_37 = arith.constant 1 : index
      %c0_38 = arith.constant 0 : index
      %c0_39 = arith.constant 0 : index
      %61 = vector.load %arg5[%c1_37, %c0_38, %c0_39] : memref<3x8x128xi32, #tpu.memory_space<vmem>>, vector<1x8x128xi32>
      %62 = vector.shape_cast %61 : vector<1x8x128xi32> to vector<8x128xi32>
      %63 = vector.shape_cast %62 : vector<8x128xi32> to vector<1x8x128xi32>
      %cst_40 = arith.constant dense<0> : vector<1xi32>
      %64 = vector.multi_reduction <add>, %63, %cst_40 [1, 2] : vector<1x8x128xi32> to vector<1xi32>
      %65 = vector.shape_cast %64 : vector<1xi32> to vector<1x1x1xi32>
      %66 = vector.extract %65[0, 0, 0] : i32 from vector<1x1x1xi32>
      %67 = arith.sitofp %66 : i32 to f32
      %c2_41 = arith.constant 2 : index
      %c0_42 = arith.constant 0 : index
      %c0_43 = arith.constant 0 : index
      %68 = vector.load %arg5[%c2_41, %c0_42, %c0_43] : memref<3x8x128xi32, #tpu.memory_space<vmem>>, vector<1x8x128xi32>
      %69 = vector.shape_cast %68 : vector<1x8x128xi32> to vector<8x128xi32>
      %70 = vector.shape_cast %69 : vector<8x128xi32> to vector<1x8x128xi32>
      %cst_44 = arith.constant dense<0> : vector<1xi32>
      %71 = vector.multi_reduction <add>, %70, %cst_44 [1, 2] : vector<1x8x128xi32> to vector<1xi32>
      %72 = vector.shape_cast %71 : vector<1xi32> to vector<1x1x1xi32>
      %73 = vector.extract %72[0, 0, 0] : i32 from vector<1x1x1xi32>
      %74 = arith.sitofp %73 : i32 to f32
      %75 = tpu.iota {dimensions = array<i32: 0>} : vector<8x128xi32>
      %c0_i32_45 = arith.constant 0 : i32
      %76 = vector.broadcast %c0_i32_45 : i32 to vector<8x128xi32>
      %77 = arith.cmpi eq, %75, %76 : vector<8x128xi32>
      %c1_i32_46 = arith.constant 1 : i32
      %78 = vector.broadcast %c1_i32_46 : i32 to vector<8x128xi32>
      %79 = arith.cmpi eq, %75, %78 : vector<8x128xi32>
      %c2_i32 = arith.constant 2 : i32
      %80 = vector.broadcast %c2_i32 : i32 to vector<8x128xi32>
      %81 = arith.cmpi eq, %75, %80 : vector<8x128xi32>
      %cst_47 = arith.constant 0.000000e+00 : f32
      %82 = vector.broadcast %74 : f32 to vector<8x128xf32>
      %83 = vector.broadcast %cst_47 : f32 to vector<8x128xf32>
      %84 = arith.select %81, %82, %83 : vector<8x128xi1>, vector<8x128xf32>
      %85 = vector.broadcast %67 : f32 to vector<8x128xf32>
      %86 = arith.select %79, %85, %84 : vector<8x128xi1>, vector<8x128xf32>
      %87 = vector.broadcast %60 : f32 to vector<8x128xf32>
      %88 = arith.select %77, %87, %86 : vector<8x128xi1>, vector<8x128xf32>
      %c0_48 = arith.constant 0 : index
      %c0_49 = arith.constant 0 : index
      %c0_50 = arith.constant 0 : index
      %89 = vector.load %arg4[%c0_48, %c0_49, %c0_50] : memref<1x8x128xf32, #tpu.memory_space<vmem>>, vector<1x8x128xf32>
      %90 = vector.shape_cast %89 : vector<1x8x128xf32> to vector<8x128xf32>
      %91 = vector.shape_cast %88 : vector<8x128xf32> to vector<1x8x128xf32>
      tpu.vector_store %arg4[%c0_48, %c0_49, %c0_50], %91 {strides = array<i32>} : memref<1x8x128xf32, #tpu.memory_space<vmem>>, vector<1x8x128xf32>,
    } else {
    }
    return
  }
  func.func @transform_0(%arg0: i32, %arg1: i32) -> (i32, i32, i32) {
    %c1_i32 = arith.constant 1 : i32
    %0 = arith.muli %arg0, %c1_i32 : i32
    %1 = arith.addi %0, %arg1 : i32
    %c0_i32 = arith.constant 0 : i32
    %c0_i32_0 = arith.constant 0 : i32
    %c0_i32_1 = arith.constant 0 : i32
    return %c0_i32, %1, %c0_i32_0 : i32, i32, i32
  }
  func.func @transform_1(%arg0: i32, %arg1: i32) -> (i32, i32) {
    %c1_i32 = arith.constant 1 : i32
    %0 = arith.muli %arg0, %c1_i32 : i32
    %1 = arith.addi %0, %arg1 : i32
    %c0_i32 = arith.constant 0 : i32
    %c0_i32_0 = arith.constant 0 : i32
    return %1, %c0_i32 : i32, i32
  }
  func.func @transform_2(%arg0: i32, %arg1: i32) -> (i32, i32, i32) {
    %c0_i32 = arith.constant 0 : i32
    %c0_i32_0 = arith.constant 0 : i32
    %c0_i32_1 = arith.constant 0 : i32
    return %arg0, %c0_i32, %c0_i32_0 : i32, i32, i32
  }
}

</mosaic_0001>

<llo_original>
// kernel: f1_loss.1
$region0: #{f1_loss.1}
  #allocation0 [shape = 'u32[]', space=smem, size = 0x4, offset = 0x4, fixed_abs, tag = 'smem constant byte address 0x4 - core index']
  #allocation1 [shape = 'u32[144,128]{1,0:T(1,128)}', space=vmem, size = 0x12000, scoped, tag = 'internal scratch']
  #allocation2 [shape = 's32[3,8,128]{2,1,0:T(8,128)}', space=vmem, size = 0x3000, scoped, tag = 'scratch operand']
  %s0 = inlined_call_operand.vmem [shape: f32[2,32,128], index: 0, kind: input, shape index: {}]
  %s1 = inlined_call_operand.vmem [shape: s8[32,128], index: 1, kind: input, shape index: {}]
  %s2 = inlined_call_operand.vmem [shape: f32[1,8,128], index: 2, kind: output, shape index: {}]
  %s3 = sld [smem:[#allocation0]]
  $region26: #{f1_loss.1} parent=0
    _
  %s5 = ssub.s32 1, %s3
  %s6 = scalar_select 0, %s5, %s3
  // Predicated region
  $region2: #{f1_loss.1} parent=0 // pred_check
    _
  $region3: #{f1_loss.1} parent=0 // pred_check_branch
    %8 = sbr.rel (0) target = $region5
  $region4: #{f1_loss.1} parent=0 // pred_region
    %s9 = sadd.s32 0, 0
    %s10 = smul.u32 4, %s9
    %p11 = scmp.lt.s32.totalorder %s10, 3
    %s12 = scalar_select %p11, %s10, 3
    %s13 = smul.addr %s12, 8
    %s14 = scalar_lea.vmem %s0, %s13
    %s15 = sadd.s32 0, 0
    %s16 = smul.u32 4, %s15
  $region5: #{f1_loss.1} parent=0 // pred_fallthru
    _
  // Predicated region
  $region6: #{f1_loss.1} parent=0 // pred_check
    _
  $region7: #{f1_loss.1} parent=0 // pred_check_branch
    %18 = sbr.rel (0) target = $region9
  $region8: #{f1_loss.1} parent=0 // pred_region
    %s19 = sadd.s32 0, 0
    %p20 = scmp.lt.s32.totalorder %s19, 0
    %s21 = scalar_select %p20, %s19, 0
    %s22 = smul.addr %s21, 8
    %s23 = scalar_lea.vmem %s1, %s22
    %s24 = sadd.s32 0, 0
  $region9: #{f1_loss.1} parent=0 // pred_fallthru
    _
  %s25 = sadd.s32 0, 0
  %s26 = smul.u32 4, %s25
  %p27 = scmp.lt.s32.totalorder %s26, 3
  %s28 = scalar_select %p27, %s26, 3
  %s29 = smul.addr %s28, 8
  %s30 = scalar_lea.vmem %s0, %s29
  %s31 = sadd.s32 0, 0
  %p32 = scmp.lt.s32.totalorder %s31, 0
  %s33 = scalar_select %p32, %s31, 0
  %s34 = smul.addr %s33, 8
  %s35 = scalar_lea.vmem %s1, %s34
  %s36 = sadd.s32 0, 0
  %s37 = smul.u32 4, %s36
  %p38 = scmp.lt.s32.totalorder %s37, 3
  %s39 = scalar_select %p38, %s37, 3
  %s40 = smul.addr %s39, 8
  %s41 = scalar_lea.vmem %s0, %s40
  %s42 = sadd.s32 0, 0
  %s43 = smul.u32 4, %s42
  %s44 = sadd.s32 0, 0
  %p45 = scmp.lt.s32.totalorder %s44, 0
  %s46 = scalar_select %p45, %s44, 0
  %s47 = smul.addr %s46, 8
  %s48 = scalar_lea.vmem %s1, %s47
  %s49 = sadd.s32 0, 0
  %p50 = scmp.eq.s32.totalorder 0, 0
  // Predicated region
  $region10: #{f1_loss.1} parent=0 // pred_check
    %p51 = pneg %p50
  $region11: #{f1_loss.1} parent=0 // pred_check_branch
    %53 = sbr.rel (%p51) target = $region13
  $region12: #{f1_loss.1} parent=0 // pred_region
    %54 = vst [vmem:[#allocation2] sm:$0xff] 0
    %55 = vst [vmem:[#allocation2 + $0x8] sm:$0xff] 0
    %56 = vst [vmem:[#allocation2 + $0x10] sm:$0xff] 0
  $region13: #{f1_loss.1} parent=0 // pred_fallthru
    _
  %v57 = vld [vmem:[%s48] sm:$0xff]
  %v58 = vunpack.c.0.s8 %v57
  %v59 = vunpack.c.1.s8 %v57
  %v60 = vunpack.c.2.s8 %v57
  %v61 = vunpack.c.3.s8 %v57
  %v62 = vld [vmem:[%s41] sm:$0xff]
  %v63 = vld [vmem:[%s41 + $0x8] sm:$0xff]
  %v64 = vld [vmem:[%s41 + $0x10] sm:$0xff]
  %v65 = vld [vmem:[%s41 + $0x18] sm:$0xff]
  %s66 = scalar_lea.vmem %s41, 32
  %v67 = vld [vmem:[%s66] sm:$0xff]
  %v68 = vld [vmem:[%s66 + $0x8] sm:$0xff]
  %v69 = vld [vmem:[%s66 + $0x10] sm:$0xff]
  %v70 = vld [vmem:[%s66 + $0x18] sm:$0xff]
  %vm71 = vcmp.gt.f32.partialorder %v67, %v62
  %vm72 = vcmp.gt.f32.partialorder %v68, %v63
  %vm73 = vcmp.gt.f32.partialorder %v69, %v64
  %vm74 = vcmp.gt.f32.partialorder %v70, %v65
  %v75 = vsel %vm71, 1, 0
  %v76 = vsel %vm72, 1, 0
  %v77 = vsel %vm73, 1, 0
  %v78 = vsel %vm74, 1, 0
  %vm79 = vcmp.eq.s32.totalorder %v75, 1
  %vm80 = vcmp.eq.s32.totalorder %v76, 1
  %vm81 = vcmp.eq.s32.totalorder %v77, 1
  %vm82 = vcmp.eq.s32.totalorder %v78, 1
  %vm83 = vcmp.eq.s32.totalorder %v75, 0
  %vm84 = vcmp.eq.s32.totalorder %v76, 0
  %vm85 = vcmp.eq.s32.totalorder %v77, 0
  %vm86 = vcmp.eq.s32.totalorder %v78, 0
  %vm87 = vcmp.eq.s32.totalorder %v58, 1
  %vm88 = vcmp.eq.s32.totalorder %v59, 1
  %vm89 = vcmp.eq.s32.totalorder %v60, 1
  %vm90 = vcmp.eq.s32.totalorder %v61, 1
  %vm91 = vcmp.eq.s32.totalorder %v58, 0
  %vm92 = vcmp.eq.s32.totalorder %v59, 0
  %vm93 = vcmp.eq.s32.totalorder %v60, 0
  %vm94 = vcmp.eq.s32.totalorder %v61, 0
  %v95 = vld [vmem:[#allocation2] sm:$0xff]
  %vm96 = vmand %vm79, %vm87
  %vm97 = vmand %vm80, %vm88
  %vm98 = vmand %vm81, %vm89
  %vm99 = vmand %vm82, %vm90
  %v100 = vsel %vm96, 1, 0
  %v101 = vsel %vm97, 1, 0
  %v102 = vsel %vm98, 1, 0
  %v103 = vsel %vm99, 1, 0
  %v104 = vadd.s32 %v100, %v101
  %v105 = vadd.s32 %v102, %v103
  %v106 = vadd.s32 %v104, %v105
  %v107 = vadd.s32 %v95, %v106
  %108 = vst [vmem:[#allocation2] sm:$0xff] %v107
  %s109 = scalar_lea.vmem [#allocation2], 8
  %v110 = vld [vmem:[%s109] sm:$0xff]
  %vm111 = vmand %vm79, %vm91
  %vm112 = vmand %vm80, %vm92
  %vm113 = vmand %vm81, %vm93
  %vm114 = vmand %vm82, %vm94
  %v115 = vsel %vm111, 1, 0
  %v116 = vsel %vm112, 1, 0
  %v117 = vsel %vm113, 1, 0
  %v118 = vsel %vm114, 1, 0
  %v119 = vadd.s32 %v115, %v116
  %v120 = vadd.s32 %v117, %v118
  %v121 = vadd.s32 %v119, %v120
  %v122 = vadd.s32 %v110, %v121
  %123 = vst [vmem:[%s109] sm:$0xff] %v122
  %s124 = scalar_lea.vmem [#allocation2], 16
  %v125 = vld [vmem:[%s124] sm:$0xff]
  %vm126 = vmand %vm83, %vm87
  %vm127 = vmand %vm84, %vm88
  %vm128 = vmand %vm85, %vm89
  %vm129 = vmand %vm86, %vm90
  %v130 = vsel %vm126, 1, 0
  %v131 = vsel %vm127, 1, 0
  %v132 = vsel %vm128, 1, 0
  %v133 = vsel %vm129, 1, 0
  %v134 = vadd.s32 %v130, %v131
  %v135 = vadd.s32 %v132, %v133
  %v136 = vadd.s32 %v134, %v135
  %v137 = vadd.s32 %v125, %v136
  %138 = vst [vmem:[%s124] sm:$0xff] %v137
  // Predicated region
  $region14: #{f1_loss.1} parent=0 // pred_check
    %p139 = pneg %p50
  $region15: #{f1_loss.1} parent=0 // pred_check_branch
    %141 = sbr.rel (%p139) target = $region17
  $region16: #{f1_loss.1} parent=0 // pred_region
    %v142 = vld [vmem:[#allocation2] sm:$0xff]
    %v143 = vand.u32 %v142, 65535
    %v144 = vshrl.u32 %v142, 16
    %v145 = vcvt.s32.f32 %v143
    %v146 = vcvt.s32.f32 %v144
    %147 = vadd.xlane.f32.xlu0 %v145
    %v148 = vpop.xlane.xlu0 %147
    %149 = vadd.xlane.f32.xlu0 %v146
    %v150 = vpop.xlane.xlu0 %149
    %v151 = vcvt.f32.s32 %v148
    %v152 = vcvt.f32.s32 %v150
    %v153 = vshll.u32 %v152, 16
    %v154 = vadd.s32 %v153, %v151
    %v155 = vrot.slane %v154, 4
    %v156 = vadd.s32 %v154, %v155
    %v157 = vrot.slane %v156, 2
    %v158 = vadd.s32 %v156, %v157
    %v159 = vrot.slane %v158, 1
    %v160 = vadd.s32 %v158, %v159
    %s161 = vtos %v160
    %s162 = scvt.s32.f32 %s161
    %v163 = vld [vmem:[%s109] sm:$0xff]
    %v164 = vand.u32 %v163, 65535
    %v165 = vshrl.u32 %v163, 16
    %v166 = vcvt.s32.f32 %v164
    %v167 = vcvt.s32.f32 %v165
    %168 = vadd.xlane.f32.xlu0 %v166
    %v169 = vpop.xlane.xlu0 %168
    %170 = vadd.xlane.f32.xlu0 %v167
    %v171 = vpop.xlane.xlu0 %170
    %v172 = vcvt.f32.s32 %v169
    %v173 = vcvt.f32.s32 %v171
    %v174 = vshll.u32 %v173, 16
    %v175 = vadd.s32 %v174, %v172
    %v176 = vrot.slane %v175, 4
    %v177 = vadd.s32 %v175, %v176
    %v178 = vrot.slane %v177, 2
    %v179 = vadd.s32 %v177, %v178
    %v180 = vrot.slane %v179, 1
    %v181 = vadd.s32 %v179, %v180
    %s182 = vtos %v181
    %s183 = scvt.s32.f32 %s182
    %v184 = vld [vmem:[%s124] sm:$0xff]
    %v185 = vand.u32 %v184, 65535
    %v186 = vshrl.u32 %v184, 16
    %v187 = vcvt.s32.f32 %v185
    %v188 = vcvt.s32.f32 %v186
    %189 = vadd.xlane.f32.xlu0 %v187
    %v190 = vpop.xlane.xlu0 %189
    %191 = vadd.xlane.f32.xlu0 %v188
    %v192 = vpop.xlane.xlu0 %191
    %v193 = vcvt.f32.s32 %v190
    %v194 = vcvt.f32.s32 %v192
    %v195 = vshll.u32 %v194, 16
    %v196 = vadd.s32 %v195, %v193
    %v197 = vrot.slane %v196, 4
    %v198 = vadd.s32 %v196, %v197
    %v199 = vrot.slane %v198, 2
    %v200 = vadd.s32 %v198, %v199
    %v201 = vrot.slane %v200, 1
    %v202 = vadd.s32 %v200, %v201
    %s203 = vtos %v202
    %s204 = scvt.s32.f32 %s203
    %v205 = vlaneseq
    %v206 = vshrl.u32 %v205, 7
    %vm207 = vcmp.eq.s32.totalorder %v206, 0
    %vm208 = vcmp.eq.s32.totalorder %v206, 1
    %vm209 = vcmp.eq.s32.totalorder %v206, 2
    %v210 = vstv %s204
    %v211 = vsel %vm209, %v210, 0.0
    %v212 = vstv %s183
    %v213 = vsel %vm208, %v212, %v211
    %v214 = vstv %s162
    %v215 = vsel %vm207, %v214, %v213
    %216 = vst [vmem:[%s2] sm:$0xff] %v215
  $region17: #{f1_loss.1} parent=0 // pred_fallthru
    _
  // Predicated region
  $region18: #{f1_loss.1} parent=0 // pred_check
    _
  $region19: #{f1_loss.1} parent=0 // pred_check_branch
    %218 = sbr.rel (0) target = $region21
  $region20: #{f1_loss.1} parent=0 // pred_region
    _
  $region21: #{f1_loss.1} parent=0 // pred_fallthru
    _
  // Predicated region
  $region22: #{f1_loss.1} parent=0 // pred_check
    _
  $region23: #{f1_loss.1} parent=0 // pred_check_branch
    %220 = sbr.rel (0) target = $region25
  $region24: #{f1_loss.1} parent=0 // pred_region
    _
  $region25: #{f1_loss.1} parent=0 // pred_fallthru
    _

</llo_original>
